<compile_context>
chip_gen: v7x
topology: tpu7x:2x2x1
jax: 0.10.0
libtpu: 0.0.40
codegen_flags: <defaults>
</compile_context>

<pallas_src>
import jax
import jax.numpy as jnp
from jax.experimental import pallas as pl
from jax.experimental.pallas import tpu as pltpu


def rnn_kernel(pre_ref, w_hh_ref, w_fc_ref, b_fc_ref, out_ref):
    # pre_ref: (T, B, H)  = emb(x) @ w_ih + (b_ih + b_hh), time-major, bias pre-folded
    # w_hh_ref: (H, H), w_fc_ref: (H, O), b_fc_ref: (1, O), out_ref: (B, O)
    T, B, H = pre_ref.shape

    w_hh = w_hh_ref[...]  # hoisted: constant RHS across all timesteps

    def step(t, h):
        # Serial critical path: one small matmul + tanh per step (input projection
        # and bias were hoisted out of the recurrence).
        return jnp.tanh(pre_ref[t]
                        + jnp.dot(h, w_hh, preferred_element_type=jnp.float32))

    h0 = jnp.zeros((B, H), dtype=jnp.float32)
    # T is a static trip count: fully unroll for cross-timestep scheduling visibility.
    h_last = jax.lax.fori_loop(0, T, step, h0, unroll=True)

    # Final linear layer on the last hidden state == fc(out[:, -1, :]).
    out_ref[...] = (jnp.dot(h_last, w_fc_ref[...], preferred_element_type=jnp.float32)
                    + b_fc_ref[...])


def rnn_forward_pallas(pre_tbh, w_hh, w_fc, b_fc):
    T, B, H = pre_tbh.shape
    O = w_fc.shape[1]
    return pl.pallas_call(
        rnn_kernel,
        out_shape=jax.ShapeDtypeStruct((B, O), jnp.float32),
        grid=(1,),
        in_specs=[
            pl.BlockSpec((T, B, H), lambda i: (0, 0, 0)),
            pl.BlockSpec((H, H), lambda i: (0, 0)),
            pl.BlockSpec((H, O), lambda i: (0, 0)),
            pl.BlockSpec((1, O), lambda i: (0, 0)),
        ],
        out_specs=pl.BlockSpec((B, O), lambda i: (0, 0)),
        compiler_params=pltpu.CompilerParams(
            dimension_semantics=("arbitrary",)),
    )(pre_tbh, w_hh, w_fc, b_fc)


def rnn_module_forward(x, params):
    """Full module forward: folded embedding/projection gather (glue) + Pallas recurrence."""
    # Fold Embedding -> input projection -> bias into one lookup table (V, H).
    proj_table = params["emb"] @ params["w_ih"] + params["b"]
    # Gather time-major directly: x.T is (T, B) -> pre is (T, B, H).  No activation transpose.
    pre_tbh = proj_table[x.T].astype(jnp.float32)
    return rnn_forward_pallas(pre_tbh, params["w_hh"], params["w_fc"], params["b_fc"])


def rnn_module_forward_ref(x, params):
    """Pure-JAX reference (un-folded) for correctness checking."""
    emb = params["emb"][x]  # (B, T, E)
    B, T, E = emb.shape
    H = params["w_hh"].shape[0]
    h = jnp.zeros((B, H), jnp.float32)
    for t in range(T):
        h = jnp.tanh(emb[:, t, :] @ params["w_ih"] + h @ params["w_hh"] + params["b"])
    return h @ params["w_fc"] + params["b_fc"]


def init_params(key, vocab_size, emb_size, padding_idx, output_size, hidden_size):
    k = jax.random.split(key, 7)
    # Embedding ~ N(0,1) like PyTorch; padding_idx row zeroed.
    emb = jax.random.normal(k[0], (vocab_size, emb_size), jnp.float32)
    emb = emb.at[padding_idx].set(0.0)
    # RNN weights ~ U(-1/sqrt(H), 1/sqrt(H)), pre-transposed to (in, out).
    s = 1.0 / jnp.sqrt(hidden_size)
    w_ih = jax.random.uniform(k[1], (emb_size, hidden_size), jnp.float32, -s, s)
    w_hh = jax.random.uniform(k[2], (hidden_size, hidden_size), jnp.float32, -s, s)
    b_ih = jax.random.uniform(k[3], (1, hidden_size), jnp.float32, -s, s)
    b_hh = jax.random.uniform(k[4], (1, hidden_size), jnp.float32, -s, s)
    # Linear weights ~ U(-1/sqrt(H), 1/sqrt(H)), pre-transposed to (H, O).
    w_fc = jax.random.uniform(k[5], (hidden_size, output_size), jnp.float32, -s, s)
    b_fc = jax.random.uniform(k[6], (1, output_size), jnp.float32, -s, s)
    return {
        "emb": emb,
        "w_ih": w_ih,
        "w_hh": w_hh,
        "b": b_ih + b_hh,   # biases only ever appear summed in the recurrence
        "w_fc": w_fc,
        "b_fc": b_fc,
    }


if __name__ == "__main__":
    vocab_size, emb_size, padding_idx = 50, 32, 0
    output_size, hidden_size = 4, 32
    batch, seq = 8, 8

    key = jax.random.PRNGKey(0)
    pkey, xkey = jax.random.split(key)
    params = init_params(pkey, vocab_size, emb_size, padding_idx, output_size, hidden_size)

    # Token ids (B, T); include some padding_idx tokens.
    x = jax.random.randint(xkey, (batch, seq), 0, vocab_size, dtype=jnp.int32)
    x = x.at[:, -1].set(padding_idx)

    out = rnn_module_forward(x, params)
    out = jax.block_until_ready(out)

    ref = rnn_module_forward_ref(x, params)
    assert out.shape == (batch, output_size)
    assert jnp.allclose(out, ref, atol=1e-5, rtol=1e-5)

    print("KERNEL_OK")
</pallas_src>

<mosaic_0001>
module attributes {stable_mosaic.version = 11 : i64} {
  func.func @rnn_kernel(%arg0: i32, %arg1: memref<8x8x32xf32, #tpu.memory_space<vmem>>, %arg2: memref<32x32xf32, #tpu.memory_space<vmem>>, %arg3: memref<32x4xf32, #tpu.memory_space<vmem>>, %arg4: memref<1x4xf32, #tpu.memory_space<vmem>>, %arg5: memref<8x4xf32, #tpu.memory_space<vmem>>) attributes {dimension_semantics = [#tpu.dimension_semantics<arbitrary>], iteration_bounds = array<i64: 1>, scalar_prefetch = 0 : i64, scratch_operands = 0 : i64, tpu.core_type = #tpu.core_type<tc>, window_params = [{pipeline_mode = #tpu.pipeline_mode<synchronous>, transform_indices = @transform_0, window_bounds = array<i64: 8, 8, 32>}, {pipeline_mode = #tpu.pipeline_mode<synchronous>, transform_indices = @transform_1, window_bounds = array<i64: 32, 32>}, {pipeline_mode = #tpu.pipeline_mode<synchronous>, transform_indices = @transform_2, window_bounds = array<i64: 32, 4>}, {pipeline_mode = #tpu.pipeline_mode<synchronous>, transform_indices = @transform_3, window_bounds = array<i64: 1, 4>}, {pipeline_mode = #tpu.pipeline_mode<synchronous>, transform_indices = @transform_4, window_bounds = array<i64: 8, 4>}]} {
    %c0 = arith.constant 0 : index
    %c0_0 = arith.constant 0 : index
    %0 = vector.load %arg2[%c0, %c0_0] : memref<32x32xf32, #tpu.memory_space<vmem>>, vector<32x32xf32>
    %cst = arith.constant 0.000000e+00 : f32
    %1 = vector.broadcast %cst : f32 to vector<8x32xf32>
    %c0_i32 = arith.constant 0 : i32
    %2 = arith.index_cast %c0_i32 : i32 to index
    %c0_1 = arith.constant 0 : index
    %c0_2 = arith.constant 0 : index
    %3 = vector.load %arg1[%2, %c0_1, %c0_2] : memref<8x8x32xf32, #tpu.memory_space<vmem>>, vector<1x8x32xf32>
    %4 = vector.shape_cast %3 : vector<1x8x32xf32> to vector<8x32xf32>
    %cst_3 = arith.constant dense<0.000000e+00> : vector<8x32xf32>
    %5 = tpu.matmul %1, %0, %cst_3 {dimension_numbers = #tpu.dot_dimension_numbers<[1], [0], [0], [1], [0, 0, 1, 1], [], []>} : vector<8x32xf32>, vector<32x32xf32>, vector<8x32xf32> -> vector<8x32xf32>
    %6 = arith.addf %4, %5 : vector<8x32xf32>
    %7 = math.tanh %6 : vector<8x32xf32>
    %c1_i32 = arith.constant 1 : i32
    %8 = arith.index_cast %c1_i32 : i32 to index
    %c0_4 = arith.constant 0 : index
    %c0_5 = arith.constant 0 : index
    %9 = vector.load %arg1[%8, %c0_4, %c0_5] : memref<8x8x32xf32, #tpu.memory_space<vmem>>, vector<1x8x32xf32>
    %10 = vector.shape_cast %9 : vector<1x8x32xf32> to vector<8x32xf32>
    %cst_6 = arith.constant dense<0.000000e+00> : vector<8x32xf32>
    %11 = tpu.matmul %7, %0, %cst_6 {dimension_numbers = #tpu.dot_dimension_numbers<[1], [0], [0], [1], [0, 0, 1, 1], [], []>} : vector<8x32xf32>, vector<32x32xf32>, vector<8x32xf32> -> vector<8x32xf32>
    %12 = arith.addf %10, %11 : vector<8x32xf32>
    %13 = math.tanh %12 : vector<8x32xf32>
    %c2_i32 = arith.constant 2 : i32
    %14 = arith.index_cast %c2_i32 : i32 to index
    %c0_7 = arith.constant 0 : index
    %c0_8 = arith.constant 0 : index
    %15 = vector.load %arg1[%14, %c0_7, %c0_8] : memref<8x8x32xf32, #tpu.memory_space<vmem>>, vector<1x8x32xf32>
    %16 = vector.shape_cast %15 : vector<1x8x32xf32> to vector<8x32xf32>
    %cst_9 = arith.constant dense<0.000000e+00> : vector<8x32xf32>
    %17 = tpu.matmul %13, %0, %cst_9 {dimension_numbers = #tpu.dot_dimension_numbers<[1], [0], [0], [1], [0, 0, 1, 1], [], []>} : vector<8x32xf32>, vector<32x32xf32>, vector<8x32xf32> -> vector<8x32xf32>
    %18 = arith.addf %16, %17 : vector<8x32xf32>
    %19 = math.tanh %18 : vector<8x32xf32>
    %c3_i32 = arith.constant 3 : i32
    %20 = arith.index_cast %c3_i32 : i32 to index
    %c0_10 = arith.constant 0 : index
    %c0_11 = arith.constant 0 : index
    %21 = vector.load %arg1[%20, %c0_10, %c0_11] : memref<8x8x32xf32, #tpu.memory_space<vmem>>, vector<1x8x32xf32>
    %22 = vector.shape_cast %21 : vector<1x8x32xf32> to vector<8x32xf32>
    %cst_12 = arith.constant dense<0.000000e+00> : vector<8x32xf32>
    %23 = tpu.matmul %19, %0, %cst_12 {dimension_numbers = #tpu.dot_dimension_numbers<[1], [0], [0], [1], [0, 0, 1, 1], [], []>} : vector<8x32xf32>, vector<32x32xf32>, vector<8x32xf32> -> vector<8x32xf32>
    %24 = arith.addf %22, %23 : vector<8x32xf32>
    %25 = math.tanh %24 : vector<8x32xf32>
    %c4_i32 = arith.constant 4 : i32
    %26 = arith.index_cast %c4_i32 : i32 to index
    %c0_13 = arith.constant 0 : index
    %c0_14 = arith.constant 0 : index
    %27 = vector.load %arg1[%26, %c0_13, %c0_14] : memref<8x8x32xf32, #tpu.memory_space<vmem>>, vector<1x8x32xf32>
    %28 = vector.shape_cast %27 : vector<1x8x32xf32> to vector<8x32xf32>
    %cst_15 = arith.constant dense<0.000000e+00> : vector<8x32xf32>
    %29 = tpu.matmul %25, %0, %cst_15 {dimension_numbers = #tpu.dot_dimension_numbers<[1], [0], [0], [1], [0, 0, 1, 1], [], []>} : vector<8x32xf32>, vector<32x32xf32>, vector<8x32xf32> -> vector<8x32xf32>
    %30 = arith.addf %28, %29 : vector<8x32xf32>
    %31 = math.tanh %30 : vector<8x32xf32>
    %c5_i32 = arith.constant 5 : i32
    %32 = arith.index_cast %c5_i32 : i32 to index
    %c0_16 = arith.constant 0 : index
    %c0_17 = arith.constant 0 : index
    %33 = vector.load %arg1[%32, %c0_16, %c0_17] : memref<8x8x32xf32, #tpu.memory_space<vmem>>, vector<1x8x32xf32>
    %34 = vector.shape_cast %33 : vector<1x8x32xf32> to vector<8x32xf32>
    %cst_18 = arith.constant dense<0.000000e+00> : vector<8x32xf32>
    %35 = tpu.matmul %31, %0, %cst_18 {dimension_numbers = #tpu.dot_dimension_numbers<[1], [0], [0], [1], [0, 0, 1, 1], [], []>} : vector<8x32xf32>, vector<32x32xf32>, vector<8x32xf32> -> vector<8x32xf32>
    %36 = arith.addf %34, %35 : vector<8x32xf32>
    %37 = math.tanh %36 : vector<8x32xf32>
    %c6_i32 = arith.constant 6 : i32
    %38 = arith.index_cast %c6_i32 : i32 to index
    %c0_19 = arith.constant 0 : index
    %c0_20 = arith.constant 0 : index
    %39 = vector.load %arg1[%38, %c0_19, %c0_20] : memref<8x8x32xf32, #tpu.memory_space<vmem>>, vector<1x8x32xf32>
    %40 = vector.shape_cast %39 : vector<1x8x32xf32> to vector<8x32xf32>
    %cst_21 = arith.constant dense<0.000000e+00> : vector<8x32xf32>
    %41 = tpu.matmul %37, %0, %cst_21 {dimension_numbers = #tpu.dot_dimension_numbers<[1], [0], [0], [1], [0, 0, 1, 1], [], []>} : vector<8x32xf32>, vector<32x32xf32>, vector<8x32xf32> -> vector<8x32xf32>
    %42 = arith.addf %40, %41 : vector<8x32xf32>
    %43 = math.tanh %42 : vector<8x32xf32>
    %c7_i32 = arith.constant 7 : i32
    %44 = arith.index_cast %c7_i32 : i32 to index
    %c0_22 = arith.constant 0 : index
    %c0_23 = arith.constant 0 : index
    %45 = vector.load %arg1[%44, %c0_22, %c0_23] : memref<8x8x32xf32, #tpu.memory_space<vmem>>, vector<1x8x32xf32>
    %46 = vector.shape_cast %45 : vector<1x8x32xf32> to vector<8x32xf32>
    %cst_24 = arith.constant dense<0.000000e+00> : vector<8x32xf32>
    %47 = tpu.matmul %43, %0, %cst_24 {dimension_numbers = #tpu.dot_dimension_numbers<[1], [0], [0], [1], [0, 0, 1, 1], [], []>} : vector<8x32xf32>, vector<32x32xf32>, vector<8x32xf32> -> vector<8x32xf32>
    %48 = arith.addf %46, %47 : vector<8x32xf32>
    %49 = math.tanh %48 : vector<8x32xf32>
    %c8_i32 = arith.constant 8 : i32
    %c0_25 = arith.constant 0 : index
    %c0_26 = arith.constant 0 : index
    %50 = vector.load %arg3[%c0_25, %c0_26] : memref<32x4xf32, #tpu.memory_space<vmem>>, vector<32x4xf32>
    %cst_27 = arith.constant dense<0.000000e+00> : vector<8x4xf32>
    %51 = tpu.matmul %49, %50, %cst_27 {dimension_numbers = #tpu.dot_dimension_numbers<[1], [0], [0], [1], [0, 0, 1, 1], [], []>} : vector<8x32xf32>, vector<32x4xf32>, vector<8x4xf32> -> vector<8x4xf32>
    %c0_28 = arith.constant 0 : index
    %c0_29 = arith.constant 0 : index
    %52 = vector.load %arg4[%c0_28, %c0_29] : memref<1x4xf32, #tpu.memory_space<vmem>>, vector<1x4xf32>
    %53 = vector.broadcast %52 : vector<1x4xf32> to vector<8x4xf32>
    %54 = arith.addf %51, %53 : vector<8x4xf32>
    %c0_30 = arith.constant 0 : index
    %c0_31 = arith.constant 0 : index
    %55 = vector.load %arg5[%c0_30, %c0_31] : memref<8x4xf32, #tpu.memory_space<vmem>>, vector<8x4xf32>
    tpu.vector_store %arg5[%c0_30, %c0_31], %54 {strides = array<i32>} : memref<8x4xf32, #tpu.memory_space<vmem>>, vector<8x4xf32>,
    return
  }
  func.func @transform_0(%arg0: i32) -> (i32, i32, i32) {
    %c0_i32 = arith.constant 0 : i32
    %c0_i32_0 = arith.constant 0 : i32
    %c0_i32_1 = arith.constant 0 : i32
    %c0_i32_2 = arith.constant 0 : i32
    return %c0_i32, %c0_i32_0, %c0_i32_1 : i32, i32, i32
  }
  func.func @transform_1(%arg0: i32) -> (i32, i32) {
    %c0_i32 = arith.constant 0 : i32
    %c0_i32_0 = arith.constant 0 : i32
    %c0_i32_1 = arith.constant 0 : i32
    return %c0_i32, %c0_i32_0 : i32, i32
  }
  func.func @transform_2(%arg0: i32) -> (i32, i32) {
    %c0_i32 = arith.constant 0 : i32
    %c0_i32_0 = arith.constant 0 : i32
    %c0_i32_1 = arith.constant 0 : i32
    return %c0_i32, %c0_i32_0 : i32, i32
  }
  func.func @transform_3(%arg0: i32) -> (i32, i32) {
    %c0_i32 = arith.constant 0 : i32
    %c0_i32_0 = arith.constant 0 : i32
    %c0_i32_1 = arith.constant 0 : i32
    return %c0_i32, %c0_i32_0 : i32, i32
  }
  func.func @transform_4(%arg0: i32) -> (i32, i32) {
    %c0_i32 = arith.constant 0 : i32
    %c0_i32_0 = arith.constant 0 : i32
    %c0_i32_1 = arith.constant 0 : i32
    return %c0_i32, %c0_i32_0 : i32, i32
  }
}

</mosaic_0001>

<llo_original>
// kernel: tpu_custom_call.1
$region0: #{tpu_custom_call.1}
  #allocation0 [shape = 'u32[]', space=smem, size = 0x4, offset = 0x4, fixed_abs, tag = 'smem constant byte address 0x4 - core index']
  #allocation1 [shape = 'u32[144,128]{1,0:T(1,128)}', space=vmem, size = 0x12000, scoped, tag = 'internal scratch']
  %s0 = inlined_call_operand.hbm [shape: f32[8,8,32], index: 0, kind: input, shape index: {}]
  %s1 = inlined_call_operand.vmem [shape: f32[32,32], index: 1, kind: input, shape index: {}]
  %s2 = inlined_call_operand.vmem [shape: f32[32,4], index: 2, kind: input, shape index: {}]
  %s3 = inlined_call_operand.vmem [shape: f32[1,4], index: 3, kind: input, shape index: {}]
  %s4 = inlined_call_operand.vmem [shape: f32[8,4], index: 4, kind: output, shape index: {}]
  %s5 = sld [smem:[#allocation0]]
  $region30: #{tpu_custom_call.1} parent=0
    _
  %s7 = ssub.s32 1, %s5
  %s8 = scalar_select 0, %s7, %s5
  $region1: #{tpu_custom_call.1} parent=0
    #allocation2 [shape = 'u8[32768]{0}', space=vmem, size = 0x8000, scoped, tag = 'input window, operand 0, single buffered']
    #allocation3 [shape = 's32[1]{0}', space=sflag, size = 0x4, scoped, tag = 'scoped memory for tpu_custom_call.1']
    %9 = vsyncpa [#allocation3], 0
    // Predicated region
    $region2: #{tpu_custom_call.1} parent=1 // pred_check
      _
    $region3: #{tpu_custom_call.1} parent=1 // pred_check_branch
      %11 = sbr.rel (0) target = $region5
    $region4: #{tpu_custom_call.1} parent=1 // pred_region
      %s13 = ssub.s32 1024, 1024
      %14 = vsyncadd [#allocation3], %s13
      %s15 = sshll.u32 [#allocation2], 4
      %s16 = int_to_ptr.vmem [resolvable:$true] %s15
      %21 = dma.hbm_to_vmem [thread:$0]  %s0, 1024, %s16, [#allocation3], 128, 128, 8
    $region5: #{tpu_custom_call.1} parent=1 // pred_fallthru
      _
    // Predicated region
    $region6: #{tpu_custom_call.1} parent=1 // pred_check
      _
    $region7: #{tpu_custom_call.1} parent=1 // pred_check_branch
      %23 = sbr.rel (0) target = $region9
    $region8: #{tpu_custom_call.1} parent=1 // pred_region
      _
    $region9: #{tpu_custom_call.1} parent=1 // pred_fallthru
      _
    // Predicated region
    $region10: #{tpu_custom_call.1} parent=1 // pred_check
      _
    $region11: #{tpu_custom_call.1} parent=1 // pred_check_branch
      %25 = sbr.rel (0) target = $region13
    $region12: #{tpu_custom_call.1} parent=1 // pred_region
      _
    $region13: #{tpu_custom_call.1} parent=1 // pred_fallthru
      _
    // Predicated region
    $region14: #{tpu_custom_call.1} parent=1 // pred_check
      _
    $region15: #{tpu_custom_call.1} parent=1 // pred_check_branch
      %27 = sbr.rel (0) target = $region17
    $region16: #{tpu_custom_call.1} parent=1 // pred_region
      _
    $region17: #{tpu_custom_call.1} parent=1 // pred_fallthru
      _
    // Predicated region
    $region18: #{tpu_custom_call.1} parent=1 // pred_check
      _
    $region19: #{tpu_custom_call.1} parent=1 // pred_check_branch
      %29 = sbr.rel (0) target = $region21
    $region20: #{tpu_custom_call.1} parent=1 // pred_region
      %30 = dma.done [#allocation3], 1024
    $region21: #{tpu_custom_call.1} parent=1 // pred_fallthru
      _
    %v31 = vld [vmem:[%s1] sm:$0xff]
    %v32 = vld [vmem:[%s1 + $0x8] sm:$0xff]
    %v33 = vld [vmem:[%s1 + $0x10] sm:$0xff]
    %v34 = vld [vmem:[%s1 + $0x18] sm:$0xff]
    %v35 = vld [vmem:[#allocation2] sm:$0xff]
    %vm36 = vcmask 261120
    %v38 = vsel %vm36, 0.0, 0
    %40 = vmatprep.subr.mxu0 0.0
    %41 = vmatpush1.msra.mxu0 %v31
    %42 = vmatprep.subr.mxu0 0.0
    %43 = vmatpush1.msra.mxu0 %v32
    %44 = vmatprep.subr.mxu0 0.0
    %45 = vmatpush1.msra.mxu0 %v33
    %46 = vmatprep.subr.mxu0 0.0
    %47 = vmatpush1.msra.mxu0 %v34
    %48 = vmatprep.subr.mxu0 0.0
    %49 = vmatpush1.msra.mxu0 0.0
    %50 = vmatprep.subr.mxu0 0.0
    %51 = vmatpush1.msra.mxu0 0.0
    %52 = vmatprep.subr.mxu0 0.0
    %53 = vmatpush1.msra.mxu0 0.0
    %54 = vmatprep.subr.mxu0 0.0
    %55 = vmatpush1.msra.mxu0 0.0
    %56 = vmatprep.subr.mxu0 0.0
    %57 = vmatpush1.msra.mxu0 0.0
    %58 = vmatprep.subr.mxu0 0.0
    %59 = vmatpush1.msra.mxu0 0.0
    %60 = vmatprep.subr.mxu0 0.0
    %61 = vmatpush1.msra.mxu0 0.0
    %62 = vmatprep.subr.mxu0 0.0
    %63 = vmatpush1.msra.mxu0 0.0
    %64 = vmatprep.subr.mxu0 0.0
    %65 = vmatpush1.msra.mxu0 0.0
    %66 = vmatprep.subr.mxu0 0.0
    %67 = vmatpush1.msra.mxu0 0.0
    %68 = vmatprep.subr.mxu0 0.0
    %69 = vmatpush1.msra.mxu0 0.0
    %70 = vmatprep.subr.mxu0 0.0
    %71 = vmatpush1.msra.mxu0 0.0
    %72 = vmatprep.subr.mxu0 0.0
    %73 = vmatpush1.msra.mxu0 0.0
    %74 = vmatprep.subr.mxu0 0.0
    %75 = vmatpush1.msra.mxu0 0.0
    %76 = vmatprep.subr.mxu0 0.0
    %77 = vmatpush1.msra.mxu0 0.0
    %78 = vmatprep.subr.mxu0 0.0
    %79 = vmatpush1.msra.mxu0 0.0
    %80 = vmatprep.subr.mxu0 0.0
    %81 = vmatpush1.msra.mxu0 0.0
    %82 = vmatprep.subr.mxu0 0.0
    %83 = vmatpush1.msra.mxu0 0.0
    %84 = vmatprep.subr.mxu0 0.0
    %85 = vmatpush1.msra.mxu0 0.0
    %86 = vmatprep.subr.mxu0 0.0
    %87 = vmatpush1.msra.mxu0 0.0
    %88 = vmatprep.subr.mxu0 0.0
    %89 = vmatpush1.msra.mxu0 0.0
    %90 = vmatprep.subr.mxu0 0.0
    %91 = vmatpush1.msra.mxu0 0.0
    %92 = vmatprep.subr.mxu0 0.0
    %93 = vmatpush1.msra.mxu0 0.0
    %94 = vmatprep.subr.mxu0 0.0
    %95 = vmatpush1.msra.mxu0 0.0
    %96 = vmatprep.subr.mxu0 0.0
    %97 = vmatpush1.msra.mxu0 0.0
    %98 = vmatprep.subr.mxu0 0.0
    %99 = vmatpush1.msra.mxu0 0.0
    %100 = vmatprep.subr.mxu0 0.0
    %101 = vmatpush1.msra.mxu0 0.0
    %102 = vmatprep.subr.mxu0 0.0
    %103 = vmatpush1.msra.mxu0 0.0
    %104 = vmatprep.mubr.f32.mxu0 0.0
    %105 = vmatmul.mubr.f32.gmra.mrb[0].mxu0 %v38
    %v106 = vpop.f32.mrb[0].mxu0
    %v107 = vadd.f32 0.0, %v106
    %v108 = vpop.f32.mrb[0].mxu0
    %109 = vdwg.mxu0
    %v110 = vadd.f32 %v35, %v107
    %v111 = vtanh.pop %v110
    %s112 = scalar_lea.vmem [#allocation2], 8
    %v113 = vld [vmem:[%s112] sm:$0xff]
    %v115 = vsel %vm36, %v111, 0
    %117 = vmatprep.subr.mxu0 0.0
    %118 = vmatpush1.msra.mxu0 %v31
    %119 = vmatprep.subr.mxu0 0.0
    %120 = vmatpush1.msra.mxu0 %v32
    %121 = vmatprep.subr.mxu0 0.0
    %122 = vmatpush1.msra.mxu0 %v33
    %123 = vmatprep.subr.mxu0 0.0
    %124 = vmatpush1.msra.mxu0 %v34
    %125 = vmatprep.subr.mxu0 0.0
    %126 = vmatpush1.msra.mxu0 0.0
    %127 = vmatprep.subr.mxu0 0.0
    %128 = vmatpush1.msra.mxu0 0.0
    %129 = vmatprep.subr.mxu0 0.0
    %130 = vmatpush1.msra.mxu0 0.0
    %131 = vmatprep.subr.mxu0 0.0
    %132 = vmatpush1.msra.mxu0 0.0
    %133 = vmatprep.subr.mxu0 0.0
    %134 = vmatpush1.msra.mxu0 0.0
    %135 = vmatprep.subr.mxu0 0.0
    %136 = vmatpush1.msra.mxu0 0.0
    %137 = vmatprep.subr.mxu0 0.0
    %138 = vmatpush1.msra.mxu0 0.0
    %139 = vmatprep.subr.mxu0 0.0
    %140 = vmatpush1.msra.mxu0 0.0
    %141 = vmatprep.subr.mxu0 0.0
    %142 = vmatpush1.msra.mxu0 0.0
    %143 = vmatprep.subr.mxu0 0.0
    %144 = vmatpush1.msra.mxu0 0.0
    %145 = vmatprep.subr.mxu0 0.0
    %146 = vmatpush1.msra.mxu0 0.0
    %147 = vmatprep.subr.mxu0 0.0
    %148 = vmatpush1.msra.mxu0 0.0
    %149 = vmatprep.subr.mxu0 0.0
    %150 = vmatpush1.msra.mxu0 0.0
    %151 = vmatprep.subr.mxu0 0.0
    %152 = vmatpush1.msra.mxu0 0.0
    %153 = vmatprep.subr.mxu0 0.0
    %154 = vmatpush1.msra.mxu0 0.0
    %155 = vmatprep.subr.mxu0 0.0
    %156 = vmatpush1.msra.mxu0 0.0
    %157 = vmatprep.subr.mxu0 0.0
    %158 = vmatpush1.msra.mxu0 0.0
    %159 = vmatprep.subr.mxu0 0.0
    %160 = vmatpush1.msra.mxu0 0.0
    %161 = vmatprep.subr.mxu0 0.0
    %162 = vmatpush1.msra.mxu0 0.0
    %163 = vmatprep.subr.mxu0 0.0
    %164 = vmatpush1.msra.mxu0 0.0
    %165 = vmatprep.subr.mxu0 0.0
    %166 = vmatpush1.msra.mxu0 0.0
    %167 = vmatprep.subr.mxu0 0.0
    %168 = vmatpush1.msra.mxu0 0.0
    %169 = vmatprep.subr.mxu0 0.0
    %170 = vmatpush1.msra.mxu0 0.0
    %171 = vmatprep.subr.mxu0 0.0
    %172 = vmatpush1.msra.mxu0 0.0
    %173 = vmatprep.subr.mxu0 0.0
    %174 = vmatpush1.msra.mxu0 0.0
    %175 = vmatprep.subr.mxu0 0.0
    %176 = vmatpush1.msra.mxu0 0.0
    %177 = vmatprep.subr.mxu0 0.0
    %178 = vmatpush1.msra.mxu0 0.0
    %179 = vmatprep.subr.mxu0 0.0
    %180 = vmatpush1.msra.mxu0 0.0
    %181 = vmatprep.mubr.f32.mxu0 0.0
    %182 = vmatmul.mubr.f32.gmra.mrb[0].mxu0 %v115
    %v183 = vpop.f32.mrb[0].mxu0
    %v184 = vadd.f32 0.0, %v183
    %v185 = vpop.f32.mrb[0].mxu0
    %186 = vdwg.mxu0
    %v187 = vadd.f32 %v113, %v184
    %v188 = vtanh.pop %v187
    %s189 = scalar_lea.vmem [#allocation2], 16
    %v190 = vld [vmem:[%s189] sm:$0xff]
    %v192 = vsel %vm36, %v188, 0
    %194 = vmatprep.subr.mxu0 0.0
    %195 = vmatpush1.msra.mxu0 %v31
    %196 = vmatprep.subr.mxu0 0.0
    %197 = vmatpush1.msra.mxu0 %v32
    %198 = vmatprep.subr.mxu0 0.0
    %199 = vmatpush1.msra.mxu0 %v33
    %200 = vmatprep.subr.mxu0 0.0
    %201 = vmatpush1.msra.mxu0 %v34
    %202 = vmatprep.subr.mxu0 0.0
    %203 = vmatpush1.msra.mxu0 0.0
    %204 = vmatprep.subr.mxu0 0.0
    %205 = vmatpush1.msra.mxu0 0.0
    %206 = vmatprep.subr.mxu0 0.0
    %207 = vmatpush1.msra.mxu0 0.0
    %208 = vmatprep.subr.mxu0 0.0
    %209 = vmatpush1.msra.mxu0 0.0
    %210 = vmatprep.subr.mxu0 0.0
    %211 = vmatpush1.msra.mxu0 0.0
    %212 = vmatprep.subr.mxu0 0.0
    %213 = vmatpush1.msra.mxu0 0.0
    %214 = vmatprep.subr.mxu0 0.0
    %215 = vmatpush1.msra.mxu0 0.0
    %216 = vmatprep.subr.mxu0 0.0
    %217 = vmatpush1.msra.mxu0 0.0
    %218 = vmatprep.subr.mxu0 0.0
    %219 = vmatpush1.msra.mxu0 0.0
    %220 = vmatprep.subr.mxu0 0.0
    %221 = vmatpush1.msra.mxu0 0.0
    %222 = vmatprep.subr.mxu0 0.0
    %223 = vmatpush1.msra.mxu0 0.0
    %224 = vmatprep.subr.mxu0 0.0
    %225 = vmatpush1.msra.mxu0 0.0
    %226 = vmatprep.subr.mxu0 0.0
    %227 = vmatpush1.msra.mxu0 0.0
    %228 = vmatprep.subr.mxu0 0.0
    %229 = vmatpush1.msra.mxu0 0.0
    %230 = vmatprep.subr.mxu0 0.0
    %231 = vmatpush1.msra.mxu0 0.0
    %232 = vmatprep.subr.mxu0 0.0
    %233 = vmatpush1.msra.mxu0 0.0
    %234 = vmatprep.subr.mxu0 0.0
    %235 = vmatpush1.msra.mxu0 0.0
    %236 = vmatprep.subr.mxu0 0.0
    %237 = vmatpush1.msra.mxu0 0.0
    %238 = vmatprep.subr.mxu0 0.0
    %239 = vmatpush1.msra.mxu0 0.0
    %240 = vmatprep.subr.mxu0 0.0
    %241 = vmatpush1.msra.mxu0 0.0
    %242 = vmatprep.subr.mxu0 0.0
    %243 = vmatpush1.msra.mxu0 0.0
    %244 = vmatprep.subr.mxu0 0.0
    %245 = vmatpush1.msra.mxu0 0.0
    %246 = vmatprep.subr.mxu0 0.0
    %247 = vmatpush1.msra.mxu0 0.0
    %248 = vmatprep.subr.mxu0 0.0
    %249 = vmatpush1.msra.mxu0 0.0
    %250 = vmatprep.subr.mxu0 0.0
    %251 = vmatpush1.msra.mxu0 0.0
    %252 = vmatprep.subr.mxu0 0.0
    %253 = vmatpush1.msra.mxu0 0.0
    %254 = vmatprep.subr.mxu0 0.0
    %255 = vmatpush1.msra.mxu0 0.0
    %256 = vmatprep.subr.mxu0 0.0
    %257 = vmatpush1.msra.mxu0 0.0
    %258 = vmatprep.mubr.f32.mxu0 0.0
    %259 = vmatmul.mubr.f32.gmra.mrb[0].mxu0 %v192
    %v260 = vpop.f32.mrb[0].mxu0
    %v261 = vadd.f32 0.0, %v260
    %v262 = vpop.f32.mrb[0].mxu0
    %263 = vdwg.mxu0
    %v264 = vadd.f32 %v190, %v261
    %v265 = vtanh.pop %v264
    %s266 = scalar_lea.vmem [#allocation2], 24
    %v267 = vld [vmem:[%s266] sm:$0xff]
    %v269 = vsel %vm36, %v265, 0
    %271 = vmatprep.subr.mxu0 0.0
    %272 = vmatpush1.msra.mxu0 %v31
    %273 = vmatprep.subr.mxu0 0.0
    %274 = vmatpush1.msra.mxu0 %v32
    %275 = vmatprep.subr.mxu0 0.0
    %276 = vmatpush1.msra.mxu0 %v33
    %277 = vmatprep.subr.mxu0 0.0
    %278 = vmatpush1.msra.mxu0 %v34
    %279 = vmatprep.subr.mxu0 0.0
    %280 = vmatpush1.msra.mxu0 0.0
    %281 = vmatprep.subr.mxu0 0.0
    %282 = vmatpush1.msra.mxu0 0.0
    %283 = vmatprep.subr.mxu0 0.0
    %284 = vmatpush1.msra.mxu0 0.0
    %285 = vmatprep.subr.mxu0 0.0
    %286 = vmatpush1.msra.mxu0 0.0
    %287 = vmatprep.subr.mxu0 0.0
    %288 = vmatpush1.msra.mxu0 0.0
    %289 = vmatprep.subr.mxu0 0.0
    %290 = vmatpush1.msra.mxu0 0.0
    %291 = vmatprep.subr.mxu0 0.0
    %292 = vmatpush1.msra.mxu0 0.0
    %293 = vmatprep.subr.mxu0 0.0
    %294 = vmatpush1.msra.mxu0 0.0
    %295 = vmatprep.subr.mxu0 0.0
    %296 = vmatpush1.msra.mxu0 0.0
    %297 = vmatprep.subr.mxu0 0.0
    %298 = vmatpush1.msra.mxu0 0.0
    %299 = vmatprep.subr.mxu0 0.0
    %300 = vmatpush1.msra.mxu0 0.0
    %301 = vmatprep.subr.mxu0 0.0
    %302 = vmatpush1.msra.mxu0 0.0
    %303 = vmatprep.subr.mxu0 0.0
    %304 = vmatpush1.msra.mxu0 0.0
    %305 = vmatprep.subr.mxu0 0.0
    %306 = vmatpush1.msra.mxu0 0.0
    %307 = vmatprep.subr.mxu0 0.0
    %308 = vmatpush1.msra.mxu0 0.0
    %309 = vmatprep.subr.mxu0 0.0
    %310 = vmatpush1.msra.mxu0 0.0
    %311 = vmatprep.subr.mxu0 0.0
    %312 = vmatpush1.msra.mxu0 0.0
    %313 = vmatprep.subr.mxu0 0.0
    %314 = vmatpush1.msra.mxu0 0.0
    %315 = vmatprep.subr.mxu0 0.0
    %316 = vmatpush1.msra.mxu0 0.0
    %317 = vmatprep.subr.mxu0 0.0
    %318 = vmatpush1.msra.mxu0 0.0
    %319 = vmatprep.subr.mxu0 0.0
    %320 = vmatpush1.msra.mxu0 0.0
    %321 = vmatprep.subr.mxu0 0.0
    %322 = vmatpush1.msra.mxu0 0.0
    %323 = vmatprep.subr.mxu0 0.0
    %324 = vmatpush1.msra.mxu0 0.0
    %325 = vmatprep.subr.mxu0 0.0
    %326 = vmatpush1.msra.mxu0 0.0
    %327 = vmatprep.subr.mxu0 0.0
    %328 = vmatpush1.msra.mxu0 0.0
    %329 = vmatprep.subr.mxu0 0.0
    %330 = vmatpush1.msra.mxu0 0.0
    %331 = vmatprep.subr.mxu0 0.0
    %332 = vmatpush1.msra.mxu0 0.0
    %333 = vmatprep.subr.mxu0 0.0
    %334 = vmatpush1.msra.mxu0 0.0
    %335 = vmatprep.mubr.f32.mxu0 0.0
    %336 = vmatmul.mubr.f32.gmra.mrb[0].mxu0 %v269
    %v337 = vpop.f32.mrb[0].mxu0
    %v338 = vadd.f32 0.0, %v337
    %v339 = vpop.f32.mrb[0].mxu0
    %340 = vdwg.mxu0
    %v341 = vadd.f32 %v267, %v338
    %v342 = vtanh.pop %v341
    %s343 = scalar_lea.vmem [#allocation2], 32
    %v344 = vld [vmem:[%s343] sm:$0xff]
    %v346 = vsel %vm36, %v342, 0
    %348 = vmatprep.subr.mxu0 0.0
    %349 = vmatpush1.msra.mxu0 %v31
    %350 = vmatprep.subr.mxu0 0.0
    %351 = vmatpush1.msra.mxu0 %v32
    %352 = vmatprep.subr.mxu0 0.0
    %353 = vmatpush1.msra.mxu0 %v33
    %354 = vmatprep.subr.mxu0 0.0
    %355 = vmatpush1.msra.mxu0 %v34
    %356 = vmatprep.subr.mxu0 0.0
    %357 = vmatpush1.msra.mxu0 0.0
    %358 = vmatprep.subr.mxu0 0.0
    %359 = vmatpush1.msra.mxu0 0.0
    %360 = vmatprep.subr.mxu0 0.0
    %361 = vmatpush1.msra.mxu0 0.0
    %362 = vmatprep.subr.mxu0 0.0
    %363 = vmatpush1.msra.mxu0 0.0
    %364 = vmatprep.subr.mxu0 0.0
    %365 = vmatpush1.msra.mxu0 0.0
    %366 = vmatprep.subr.mxu0 0.0
    %367 = vmatpush1.msra.mxu0 0.0
    %368 = vmatprep.subr.mxu0 0.0
    %369 = vmatpush1.msra.mxu0 0.0
    %370 = vmatprep.subr.mxu0 0.0
    %371 = vmatpush1.msra.mxu0 0.0
    %372 = vmatprep.subr.mxu0 0.0
    %373 = vmatpush1.msra.mxu0 0.0
    %374 = vmatprep.subr.mxu0 0.0
    %375 = vmatpush1.msra.mxu0 0.0
    %376 = vmatprep.subr.mxu0 0.0
    %377 = vmatpush1.msra.mxu0 0.0
    %378 = vmatprep.subr.mxu0 0.0
    %379 = vmatpush1.msra.mxu0 0.0
    %380 = vmatprep.subr.mxu0 0.0
    %381 = vmatpush1.msra.mxu0 0.0
    %382 = vmatprep.subr.mxu0 0.0
    %383 = vmatpush1.msra.mxu0 0.0
    %384 = vmatprep.subr.mxu0 0.0
    %385 = vmatpush1.msra.mxu0 0.0
    %386 = vmatprep.subr.mxu0 0.0
    %387 = vmatpush1.msra.mxu0 0.0
    %388 = vmatprep.subr.mxu0 0.0
    %389 = vmatpush1.msra.mxu0 0.0
    %390 = vmatprep.subr.mxu0 0.0
    %391 = vmatpush1.msra.mxu0 0.0
    %392 = vmatprep.subr.mxu0 0.0
    %393 = vmatpush1.msra.mxu0 0.0
    %394 = vmatprep.subr.mxu0 0.0
    %395 = vmatpush1.msra.mxu0 0.0
    %396 = vmatprep.subr.mxu0 0.0
    %397 = vmatpush1.msra.mxu0 0.0
    %398 = vmatprep.subr.mxu0 0.0
    %399 = vmatpush1.msra.mxu0 0.0
    %400 = vmatprep.subr.mxu0 0.0
    %401 = vmatpush1.msra.mxu0 0.0
    %402 = vmatprep.subr.mxu0 0.0
    %403 = vmatpush1.msra.mxu0 0.0
    %404 = vmatprep.subr.mxu0 0.0
    %405 = vmatpush1.msra.mxu0 0.0
    %406 = vmatprep.subr.mxu0 0.0
    %407 = vmatpush1.msra.mxu0 0.0
    %408 = vmatprep.subr.mxu0 0.0
    %409 = vmatpush1.msra.mxu0 0.0
    %410 = vmatprep.subr.mxu0 0.0
    %411 = vmatpush1.msra.mxu0 0.0
    %412 = vmatprep.mubr.f32.mxu0 0.0
    %413 = vmatmul.mubr.f32.gmra.mrb[0].mxu0 %v346
    %v414 = vpop.f32.mrb[0].mxu0
    %v415 = vadd.f32 0.0, %v414
    %v416 = vpop.f32.mrb[0].mxu0
    %417 = vdwg.mxu0
    %v418 = vadd.f32 %v344, %v415
    %v419 = vtanh.pop %v418
    %s420 = scalar_lea.vmem [#allocation2], 40
    %v421 = vld [vmem:[%s420] sm:$0xff]
    %v423 = vsel %vm36, %v419, 0
    %425 = vmatprep.subr.mxu0 0.0
    %426 = vmatpush1.msra.mxu0 %v31
    %427 = vmatprep.subr.mxu0 0.0
    %428 = vmatpush1.msra.mxu0 %v32
    %429 = vmatprep.subr.mxu0 0.0
    %430 = vmatpush1.msra.mxu0 %v33
    %431 = vmatprep.subr.mxu0 0.0
    %432 = vmatpush1.msra.mxu0 %v34
    %433 = vmatprep.subr.mxu0 0.0
    %434 = vmatpush1.msra.mxu0 0.0
    %435 = vmatprep.subr.mxu0 0.0
    %436 = vmatpush1.msra.mxu0 0.0
    %437 = vmatprep.subr.mxu0 0.0
    %438 = vmatpush1.msra.mxu0 0.0
    %439 = vmatprep.subr.mxu0 0.0
    %440 = vmatpush1.msra.mxu0 0.0
    %441 = vmatprep.subr.mxu0 0.0
    %442 = vmatpush1.msra.mxu0 0.0
    %443 = vmatprep.subr.mxu0 0.0
    %444 = vmatpush1.msra.mxu0 0.0
    %445 = vmatprep.subr.mxu0 0.0
    %446 = vmatpush1.msra.mxu0 0.0
    %447 = vmatprep.subr.mxu0 0.0
    %448 = vmatpush1.msra.mxu0 0.0
    %449 = vmatprep.subr.mxu0 0.0
    %450 = vmatpush1.msra.mxu0 0.0
    %451 = vmatprep.subr.mxu0 0.0
    %452 = vmatpush1.msra.mxu0 0.0
    %453 = vmatprep.subr.mxu0 0.0
    %454 = vmatpush1.msra.mxu0 0.0
    %455 = vmatprep.subr.mxu0 0.0
    %456 = vmatpush1.msra.mxu0 0.0
    %457 = vmatprep.subr.mxu0 0.0
    %458 = vmatpush1.msra.mxu0 0.0
    %459 = vmatprep.subr.mxu0 0.0
    %460 = vmatpush1.msra.mxu0 0.0
    %461 = vmatprep.subr.mxu0 0.0
    %462 = vmatpush1.msra.mxu0 0.0
    %463 = vmatprep.subr.mxu0 0.0
    %464 = vmatpush1.msra.mxu0 0.0
    %465 = vmatprep.subr.mxu0 0.0
    %466 = vmatpush1.msra.mxu0 0.0
    %467 = vmatprep.subr.mxu0 0.0
    %468 = vmatpush1.msra.mxu0 0.0
    %469 = vmatprep.subr.mxu0 0.0
    %470 = vmatpush1.msra.mxu0 0.0
    %471 = vmatprep.subr.mxu0 0.0
    %472 = vmatpush1.msra.mxu0 0.0
    %473 = vmatprep.subr.mxu0 0.0
    %474 = vmatpush1.msra.mxu0 0.0
    %475 = vmatprep.subr.mxu0 0.0
    %476 = vmatpush1.msra.mxu0 0.0
    %477 = vmatprep.subr.mxu0 0.0
    %478 = vmatpush1.msra.mxu0 0.0
    %479 = vmatprep.subr.mxu0 0.0
    %480 = vmatpush1.msra.mxu0 0.0
    %481 = vmatprep.subr.mxu0 0.0
    %482 = vmatpush1.msra.mxu0 0.0
    %483 = vmatprep.subr.mxu0 0.0
    %484 = vmatpush1.msra.mxu0 0.0
    %485 = vmatprep.subr.mxu0 0.0
    %486 = vmatpush1.msra.mxu0 0.0
    %487 = vmatprep.subr.mxu0 0.0
    %488 = vmatpush1.msra.mxu0 0.0
    %489 = vmatprep.mubr.f32.mxu0 0.0
    %490 = vmatmul.mubr.f32.gmra.mrb[0].mxu0 %v423
    %v491 = vpop.f32.mrb[0].mxu0
    %v492 = vadd.f32 0.0, %v491
    %v493 = vpop.f32.mrb[0].mxu0
    %494 = vdwg.mxu0
    %v495 = vadd.f32 %v421, %v492
    %v496 = vtanh.pop %v495
    %s497 = scalar_lea.vmem [#allocation2], 48
    %v498 = vld [vmem:[%s497] sm:$0xff]
    %v500 = vsel %vm36, %v496, 0
    %502 = vmatprep.subr.mxu0 0.0
    %503 = vmatpush1.msra.mxu0 %v31
    %504 = vmatprep.subr.mxu0 0.0
    %505 = vmatpush1.msra.mxu0 %v32
    %506 = vmatprep.subr.mxu0 0.0
    %507 = vmatpush1.msra.mxu0 %v33
    %508 = vmatprep.subr.mxu0 0.0
    %509 = vmatpush1.msra.mxu0 %v34
    %510 = vmatprep.subr.mxu0 0.0
    %511 = vmatpush1.msra.mxu0 0.0
    %512 = vmatprep.subr.mxu0 0.0
    %513 = vmatpush1.msra.mxu0 0.0
    %514 = vmatprep.subr.mxu0 0.0
    %515 = vmatpush1.msra.mxu0 0.0
    %516 = vmatprep.subr.mxu0 0.0
    %517 = vmatpush1.msra.mxu0 0.0
    %518 = vmatprep.subr.mxu0 0.0
    %519 = vmatpush1.msra.mxu0 0.0
    %520 = vmatprep.subr.mxu0 0.0
    %521 = vmatpush1.msra.mxu0 0.0
    %522 = vmatprep.subr.mxu0 0.0
    %523 = vmatpush1.msra.mxu0 0.0
    %524 = vmatprep.subr.mxu0 0.0
    %525 = vmatpush1.msra.mxu0 0.0
    %526 = vmatprep.subr.mxu0 0.0
    %527 = vmatpush1.msra.mxu0 0.0
    %528 = vmatprep.subr.mxu0 0.0
    %529 = vmatpush1.msra.mxu0 0.0
    %530 = vmatprep.subr.mxu0 0.0
    %531 = vmatpush1.msra.mxu0 0.0
    %532 = vmatprep.subr.mxu0 0.0
    %533 = vmatpush1.msra.mxu0 0.0
    %534 = vmatprep.subr.mxu0 0.0
    %535 = vmatpush1.msra.mxu0 0.0
    %536 = vmatprep.subr.mxu0 0.0
    %537 = vmatpush1.msra.mxu0 0.0
    %538 = vmatprep.subr.mxu0 0.0
    %539 = vmatpush1.msra.mxu0 0.0
    %540 = vmatprep.subr.mxu0 0.0
    %541 = vmatpush1.msra.mxu0 0.0
    %542 = vmatprep.subr.mxu0 0.0
    %543 = vmatpush1.msra.mxu0 0.0
    %544 = vmatprep.subr.mxu0 0.0
    %545 = vmatpush1.msra.mxu0 0.0
    %546 = vmatprep.subr.mxu0 0.0
    %547 = vmatpush1.msra.mxu0 0.0
    %548 = vmatprep.subr.mxu0 0.0
    %549 = vmatpush1.msra.mxu0 0.0
    %550 = vmatprep.subr.mxu0 0.0
    %551 = vmatpush1.msra.mxu0 0.0
    %552 = vmatprep.subr.mxu0 0.0
    %553 = vmatpush1.msra.mxu0 0.0
    %554 = vmatprep.subr.mxu0 0.0
    %555 = vmatpush1.msra.mxu0 0.0
    %556 = vmatprep.subr.mxu0 0.0
    %557 = vmatpush1.msra.mxu0 0.0
    %558 = vmatprep.subr.mxu0 0.0
    %559 = vmatpush1.msra.mxu0 0.0
    %560 = vmatprep.subr.mxu0 0.0
    %561 = vmatpush1.msra.mxu0 0.0
    %562 = vmatprep.subr.mxu0 0.0
    %563 = vmatpush1.msra.mxu0 0.0
    %564 = vmatprep.subr.mxu0 0.0
    %565 = vmatpush1.msra.mxu0 0.0
    %566 = vmatprep.mubr.f32.mxu0 0.0
    %567 = vmatmul.mubr.f32.gmra.mrb[0].mxu0 %v500
    %v568 = vpop.f32.mrb[0].mxu0
    %v569 = vadd.f32 0.0, %v568
    %v570 = vpop.f32.mrb[0].mxu0
    %571 = vdwg.mxu0
    %v572 = vadd.f32 %v498, %v569
    %v573 = vtanh.pop %v572
    %s574 = scalar_lea.vmem [#allocation2], 56
    %v575 = vld [vmem:[%s574] sm:$0xff]
    %v577 = vsel %vm36, %v573, 0
    %579 = vmatprep.subr.mxu0 0.0
    %580 = vmatpush1.msra.mxu0 %v31
    %581 = vmatprep.subr.mxu0 0.0
    %582 = vmatpush1.msra.mxu0 %v32
    %583 = vmatprep.subr.mxu0 0.0
    %584 = vmatpush1.msra.mxu0 %v33
    %585 = vmatprep.subr.mxu0 0.0
    %586 = vmatpush1.msra.mxu0 %v34
    %587 = vmatprep.subr.mxu0 0.0
    %588 = vmatpush1.msra.mxu0 0.0
    %589 = vmatprep.subr.mxu0 0.0
    %590 = vmatpush1.msra.mxu0 0.0
    %591 = vmatprep.subr.mxu0 0.0
    %592 = vmatpush1.msra.mxu0 0.0
    %593 = vmatprep.subr.mxu0 0.0
    %594 = vmatpush1.msra.mxu0 0.0
    %595 = vmatprep.subr.mxu0 0.0
    %596 = vmatpush1.msra.mxu0 0.0
    %597 = vmatprep.subr.mxu0 0.0
    %598 = vmatpush1.msra.mxu0 0.0
    %599 = vmatprep.subr.mxu0 0.0
    %600 = vmatpush1.msra.mxu0 0.0
    %601 = vmatprep.subr.mxu0 0.0
    %602 = vmatpush1.msra.mxu0 0.0
    %603 = vmatprep.subr.mxu0 0.0
    %604 = vmatpush1.msra.mxu0 0.0
    %605 = vmatprep.subr.mxu0 0.0
    %606 = vmatpush1.msra.mxu0 0.0
    %607 = vmatprep.subr.mxu0 0.0
    %608 = vmatpush1.msra.mxu0 0.0
    %609 = vmatprep.subr.mxu0 0.0
    %610 = vmatpush1.msra.mxu0 0.0
    %611 = vmatprep.subr.mxu0 0.0
    %612 = vmatpush1.msra.mxu0 0.0
    %613 = vmatprep.subr.mxu0 0.0
    %614 = vmatpush1.msra.mxu0 0.0
    %615 = vmatprep.subr.mxu0 0.0
    %616 = vmatpush1.msra.mxu0 0.0
    %617 = vmatprep.subr.mxu0 0.0
    %618 = vmatpush1.msra.mxu0 0.0
    %619 = vmatprep.subr.mxu0 0.0
    %620 = vmatpush1.msra.mxu0 0.0
    %621 = vmatprep.subr.mxu0 0.0
    %622 = vmatpush1.msra.mxu0 0.0
    %623 = vmatprep.subr.mxu0 0.0
    %624 = vmatpush1.msra.mxu0 0.0
    %625 = vmatprep.subr.mxu0 0.0
    %626 = vmatpush1.msra.mxu0 0.0
    %627 = vmatprep.subr.mxu0 0.0
    %628 = vmatpush1.msra.mxu0 0.0
    %629 = vmatprep.subr.mxu0 0.0
    %630 = vmatpush1.msra.mxu0 0.0
    %631 = vmatprep.subr.mxu0 0.0
    %632 = vmatpush1.msra.mxu0 0.0
    %633 = vmatprep.subr.mxu0 0.0
    %634 = vmatpush1.msra.mxu0 0.0
    %635 = vmatprep.subr.mxu0 0.0
    %636 = vmatpush1.msra.mxu0 0.0
    %637 = vmatprep.subr.mxu0 0.0
    %638 = vmatpush1.msra.mxu0 0.0
    %639 = vmatprep.subr.mxu0 0.0
    %640 = vmatpush1.msra.mxu0 0.0
    %641 = vmatprep.subr.mxu0 0.0
    %642 = vmatpush1.msra.mxu0 0.0
    %643 = vmatprep.mubr.f32.mxu0 0.0
    %644 = vmatmul.mubr.f32.gmra.mrb[0].mxu0 %v577
    %v645 = vpop.f32.mrb[0].mxu0
    %v646 = vadd.f32 0.0, %v645
    %v647 = vpop.f32.mrb[0].mxu0
    %648 = vdwg.mxu0
    %v649 = vadd.f32 %v575, %v646
    %v650 = vtanh.pop %v649
    %v651 = vld [vmem:[%s2] sm:$0xff]
    %v652 = vld [vmem:[%s2 + $0x8] sm:$0xff]
    %v653 = vld [vmem:[%s2 + $0x10] sm:$0xff]
    %v654 = vld [vmem:[%s2 + $0x18] sm:$0xff]
    %v655 = vld [vmem:[%s3] sm:$0x1]
    %v657 = vlaneseq
    %v658 = vshrl.u32 %v657, 7
    %v659 = vsub.s32 0, %v658
    %v660 = vrot.slane %v655, %v659
    %v663 = vsel %vm36, %v650, 0
    %665 = vmatprep.subr.mxu0 0.0
    %666 = vmatpush1.msra.mxu0 %v651
    %667 = vmatprep.subr.mxu0 0.0
    %668 = vmatpush1.msra.mxu0 %v652
    %669 = vmatprep.subr.mxu0 0.0
    %670 = vmatpush1.msra.mxu0 %v653
    %671 = vmatprep.subr.mxu0 0.0
    %672 = vmatpush1.msra.mxu0 %v654
    %673 = vmatprep.subr.mxu0 0.0
    %674 = vmatpush1.msra.mxu0 0.0
    %675 = vmatprep.subr.mxu0 0.0
    %676 = vmatpush1.msra.mxu0 0.0
    %677 = vmatprep.subr.mxu0 0.0
    %678 = vmatpush1.msra.mxu0 0.0
    %679 = vmatprep.subr.mxu0 0.0
    %680 = vmatpush1.msra.mxu0 0.0
    %681 = vmatprep.subr.mxu0 0.0
    %682 = vmatpush1.msra.mxu0 0.0
    %683 = vmatprep.subr.mxu0 0.0
    %684 = vmatpush1.msra.mxu0 0.0
    %685 = vmatprep.subr.mxu0 0.0
    %686 = vmatpush1.msra.mxu0 0.0
    %687 = vmatprep.subr.mxu0 0.0
    %688 = vmatpush1.msra.mxu0 0.0
    %689 = vmatprep.subr.mxu0 0.0
    %690 = vmatpush1.msra.mxu0 0.0
    %691 = vmatprep.subr.mxu0 0.0
    %692 = vmatpush1.msra.mxu0 0.0
    %693 = vmatprep.subr.mxu0 0.0
    %694 = vmatpush1.msra.mxu0 0.0
    %695 = vmatprep.subr.mxu0 0.0
    %696 = vmatpush1.msra.mxu0 0.0
    %697 = vmatprep.subr.mxu0 0.0
    %698 = vmatpush1.msra.mxu0 0.0
    %699 = vmatprep.subr.mxu0 0.0
    %700 = vmatpush1.msra.mxu0 0.0
    %701 = vmatprep.subr.mxu0 0.0
    %702 = vmatpush1.msra.mxu0 0.0
    %703 = vmatprep.subr.mxu0 0.0
    %704 = vmatpush1.msra.mxu0 0.0
    %705 = vmatprep.subr.mxu0 0.0
    %706 = vmatpush1.msra.mxu0 0.0
    %707 = vmatprep.subr.mxu0 0.0
    %708 = vmatpush1.msra.mxu0 0.0
    %709 = vmatprep.subr.mxu0 0.0
    %710 = vmatpush1.msra.mxu0 0.0
    %711 = vmatprep.subr.mxu0 0.0
    %712 = vmatpush1.msra.mxu0 0.0
    %713 = vmatprep.subr.mxu0 0.0
    %714 = vmatpush1.msra.mxu0 0.0
    %715 = vmatprep.subr.mxu0 0.0
    %716 = vmatpush1.msra.mxu0 0.0
    %717 = vmatprep.subr.mxu0 0.0
    %718 = vmatpush1.msra.mxu0 0.0
    %719 = vmatprep.subr.mxu0 0.0
    %720 = vmatpush1.msra.mxu0 0.0
    %721 = vmatprep.subr.mxu0 0.0
    %722 = vmatpush1.msra.mxu0 0.0
    %723 = vmatprep.subr.mxu0 0.0
    %724 = vmatpush1.msra.mxu0 0.0
    %725 = vmatprep.subr.mxu0 0.0
    %726 = vmatpush1.msra.mxu0 0.0
    %727 = vmatprep.subr.mxu0 0.0
    %728 = vmatpush1.msra.mxu0 0.0
    %729 = vmatprep.mubr.f32.mxu0 0.0
    %730 = vmatmul.mubr.f32.gmra.mrb[0].mxu0 %v663
    %v731 = vpop.f32.mrb[0].mxu0
    %v732 = vadd.f32 %v660, %v731
    %v733 = vpop.f32.mrb[0].mxu0
    %734 = vdwg.mxu0
    %vm735 = vcmask 31744
    %736 = vst.msk [vmem:[%s4] sm:$0xff] %vm735, %v732
    // Predicated region
    $region22: #{tpu_custom_call.1} parent=1 // pred_check
      _
    $region23: #{tpu_custom_call.1} parent=1 // pred_check_branch
      %738 = sbr.rel (0) target = $region25
    $region24: #{tpu_custom_call.1} parent=1 // pred_region
      _
    $region25: #{tpu_custom_call.1} parent=1 // pred_fallthru
      _
    // Predicated region
    $region26: #{tpu_custom_call.1} parent=1 // pred_check
      _
    $region27: #{tpu_custom_call.1} parent=1 // pred_check_branch
      %740 = sbr.rel (0) target = $region29
    $region28: #{tpu_custom_call.1} parent=1 // pred_region
      _
    $region29: #{tpu_custom_call.1} parent=1 // pred_fallthru
      _
    %741 = vsyncpa [#allocation3], 1

</llo_original>
